<compile_context>
chip_gen: v5e
topology: v5e:2x2
jax: 0.10.0
libtpu: 0.0.40
codegen_flags: <defaults>
</compile_context>

<pallas_src>
import math
import jax
import jax.numpy as jnp
import numpy as np
from jax.experimental import pallas as pl
from jax.experimental.pallas import tpu as pltpu


def _round_up(x, m):
    return -(-x // m) * m


# ----------------------------- Pallas kernel --------------------------------
def _fused_kernel(mw_ref, x_ref, w1_ref, b1_ref, w2_ref, b2_ref, g_ref, out_ref):
    """Fused forward for one batch tile.

    mw_ref  : [T, TB, 1]    f32   masked-mean weights (t < len[b]) / len[b]
    x_ref   : [T, TB, 128]  bf16  lane-packed video features (all 3 levels)
    w1_ref  : [128, 128]    bf16  block-diagonal FC_k weights (3 levels)
    b1_ref  : [1, 128]      f32   FC_k biases (lane-packed)
    w2_ref  : [128, 256]    bf16  block-diagonal per-space head weights
    b2_ref  : [1, 256]      f32   head biases (lane-packed, zero pad)
    g_ref   : [256, 256]    f32   block-diag ones: per-space group-sum matrix
    out_ref : [TB, 256]     f32   l2-normalized embeddings (lane-dense)
    """
    T = x_ref.shape[0]

    # length-masked temporal mean: accumulate over the OUTER T axis (VALU only)
    acc = x_ref[0].astype(jnp.float32) * mw_ref[0]          # [TB, 128] f32
    for t in range(1, T):
        acc = acc + x_ref[t].astype(jnp.float32) * mw_ref[t]

    # FC_k for all 3 levels in one block-diagonal matmul (bf16 MXU, f32 acc)
    fea = jnp.tanh(
        jnp.dot(acc.astype(jnp.bfloat16), w1_ref[...],
                preferred_element_type=jnp.float32) + b1_ref[...])   # [TB, 128]

    # all 3 levels x J heads in one block-diagonal matmul
    z = jnp.tanh(
        jnp.dot(fea.astype(jnp.bfloat16), w2_ref[...],
                preferred_element_type=jnp.float32) + b2_ref[...])   # [TB, 256]

    # per-space l2norm: group sums of squares via MXU (block-diag ones),
    # epsilon placement matches the reference: z / (sqrt(sum z^2) + 1e-10)
    sums = jnp.dot(z * z, g_ref[...], preferred_element_type=jnp.float32)
    out_ref[...] = z / (jnp.sqrt(sums) + 1e-10)


# ----------------------------- one-time param packing ------------------------
def pack_video_params(params, visual_feat_dims, hidden, num_spaces):
    """Assemble block-diagonal fused weights once (hoisted off the call path).

    params : list of L tuples (w1 [D_l,H], b1 [H], wv [J,H,H], bv [J,H])
    """
    L = len(params)
    H, J = hidden, num_spaces
    d_pack = _round_up(max(sum(visual_feat_dims), 1), 128)     # 112 -> 128
    h_pack = _round_up(L * H, 128)                             # 96  -> 128
    out_pack = _round_up(L * J * H, 128)                       # 192 -> 256

    w1 = np.zeros((d_pack, h_pack), np.float32)
    b1 = np.zeros((1, h_pack), np.float32)
    w2 = np.zeros((h_pack, out_pack), np.float32)
    b2 = np.zeros((1, out_pack), np.float32)
    off = 0
    for l in range(L):
        w1_l, b1_l, wv_l, bv_l = params[l]
        D = visual_feat_dims[l]
        w1[off:off + D, l * H:(l + 1) * H] = np.asarray(w1_l, np.float32)
        b1[0, l * H:(l + 1) * H] = np.asarray(b1_l, np.float32)
        for j in range(J):
            c0 = (l * J + j) * H
            w2[l * H:(l + 1) * H, c0:c0 + H] = np.asarray(wv_l[j], np.float32)
            b2[0, c0:c0 + H] = np.asarray(bv_l[j], np.float32)
        off += D

    # block-diagonal ones: column c sums the H-wide group containing c
    grp = np.arange(out_pack) // H
    g = (grp[:, None] == grp[None, :]).astype(np.float32)

    return dict(
        w1=jnp.asarray(w1, jnp.bfloat16), b1=jnp.asarray(b1, jnp.float32),
        w2=jnp.asarray(w2, jnp.bfloat16), b2=jnp.asarray(b2, jnp.float32),
        g=jnp.asarray(g, jnp.float32),
        dims=tuple(int(d) for d in visual_feat_dims),
        hidden=H, spaces=J, levels=L,
        d_pack=d_pack, h_pack=h_pack, out_pack=out_pack)


# ----------------------------- per-call wrapper -------------------------------
def video_multilevel_encode(videos, lengths, packed, *, batch_tile=256):
    """Video_multilevel_encoding forward on TPU via one gridded Pallas call.

    videos : list of L arrays [B, T, D_l]
    lengths: [B] int32
    packed : output of pack_video_params
    Returns (feas_1, feas_2, feas_3): per level, a list of J [B, H] arrays.
    """
    L, H, J = packed['levels'], packed['hidden'], packed['spaces']
    d_pack, h_pack, out_pack = packed['d_pack'], packed['h_pack'], packed['out_pack']
    B, T, _ = videos[0].shape
    d_tot = sum(packed['dims'])

    # lane-pack the levels, pad to 128 lanes, T leading, bf16 (halves x DMA bytes)
    x = jnp.concatenate([v.astype(jnp.bfloat16) for v in videos], axis=-1)
    if d_tot < d_pack:
        x = jnp.pad(x, ((0, 0), (0, 0), (0, d_pack - d_tot)))
    x = jnp.transpose(x, (1, 0, 2))                              # [T, B, 128]

    # batch tile: multiple of 16 (bf16 sublane packing); cap at 256 so the
    # double-buffered x block stays well inside v7x's 64 MiB VMEM.
    TB = min(_round_up(B, 16), _round_up(batch_tile, 16))
    Bp = _round_up(B, TB)
    if Bp > B:
        x = jnp.pad(x, ((0, 0), (0, Bp - B), (0, 0)))

    # per-frame masked-mean weights: (t < len[b]) / len[b] (guarded for len==0)
    lens_i = jnp.pad(lengths.astype(jnp.int32), (0, Bp - B), constant_values=1)
    valid = (jnp.arange(T, dtype=jnp.int32)[:, None] < lens_i[None, :])
    denom = jnp.maximum(lens_i, 1).astype(jnp.float32)
    mw = (valid.astype(jnp.float32) / denom[None, :])[:, :, None]   # [T, Bp, 1]

    const2d = lambda i: (0, 0)
    out = pl.pallas_call(
        _fused_kernel,
        out_shape=jax.ShapeDtypeStruct((Bp, out_pack), jnp.float32),
        grid=(Bp // TB,),
        in_specs=[
            pl.BlockSpec((T, TB, 1), lambda i: (0, i, 0)),        # mw
            pl.BlockSpec((T, TB, d_pack), lambda i: (0, i, 0)),   # x (bf16)
            pl.BlockSpec((d_pack, h_pack), const2d),              # w1 (resident)
            pl.BlockSpec((1, h_pack), const2d),                   # b1
            pl.BlockSpec((h_pack, out_pack), const2d),            # w2
            pl.BlockSpec((1, out_pack), const2d),                 # b2
            pl.BlockSpec((out_pack, out_pack), const2d),          # G
        ],
        out_specs=pl.BlockSpec((TB, out_pack), lambda i: (i, 0)),
        compiler_params=pltpu.CompilerParams(
            dimension_semantics=("parallel",),
            vmem_limit_bytes=32 * 1024 * 1024),
    )(mw, x, packed['w1'], packed['b1'], packed['w2'], packed['b2'], packed['g'])

    # slice the lane-dense slab back into (feas_1, feas_2, feas_3)
    feas = []
    for l in range(L):
        feas.append([out[:B, (l * J + j) * H:(l * J + j + 1) * H]
                     for j in range(J)])
    return tuple(feas)


# ----------------------------- parameter setup ------------------------------
def xavier_uniform(key, fan_in, fan_out):
    limit = math.sqrt(6.0 / (fan_in + fan_out))
    # stored as [in, out] (transposed w.r.t. torch.nn.Linear's [out, in])
    return jax.random.uniform(key, (fan_in, fan_out), jnp.float32, -limit, limit)


def make_level_params(key, d_in, hidden, num_spaces):
    keys = jax.random.split(key, 1 + num_spaces)
    w1 = xavier_uniform(keys[0], d_in, hidden)
    b1 = jnp.zeros((hidden,), jnp.float32)
    wv = jnp.stack([xavier_uniform(keys[1 + j], hidden, hidden)
                    for j in range(num_spaces)])
    bv = jnp.zeros((num_spaces, hidden), jnp.float32)
    return w1, b1, wv, bv


# ----------------------------- pure-JAX reference ---------------------------
def reference_forward(videos, lengths, params):
    """Faithful f32 reimplementation of the PyTorch forward pass."""
    feas_all = []
    for l in range(len(videos)):
        x = videos[l]
        B, T, D = x.shape
        t_idx = jnp.arange(T)[None, :]
        mask = (t_idx < lengths[:, None]).astype(jnp.float32)
        mean = (x * mask[:, :, None]).sum(1) / lengths[:, None].astype(jnp.float32)
        w1, b1, wv, bv = params[l]
        fea = jnp.tanh(jnp.dot(mean, w1, precision=jax.lax.Precision.HIGHEST) + b1)
        outs = []
        for j in range(wv.shape[0]):
            z = jnp.tanh(jnp.dot(fea, wv[j],
                                 precision=jax.lax.Precision.HIGHEST) + bv[j])
            nrm = jnp.sqrt(jnp.sum(z * z, axis=1, keepdims=True))
            outs.append(z / (nrm + 1e-10))
        feas_all.append(outs)
    return tuple(feas_all)


# ----------------------------- main ------------------------------------------
if __name__ == "__main__":
    # opt:  visual_feat_dim=[32, 32, 48], text_mapping_layers[1]=32,
    #       selected_text_feas -> J=2 spaces, activation='tanh',
    #       have_bn=False, dropout=0 (eval), visual_norm=True
    B, T = 2, 8
    visual_feat_dim = [32, 32, 48]
    H = 32
    J = 2

    key = jax.random.PRNGKey(0)
    k_in, k_p1, k_p2, k_p3 = jax.random.split(key, 4)

    kx = jax.random.split(k_in, 3)
    videos = [jax.random.normal(kx[i], (B, T, visual_feat_dim[i]), jnp.float32)
              for i in range(3)]
    lengths = jnp.array([8, 5], dtype=jnp.int32)
    # videos_origin / videos_mask are unused by the forward pass.

    params = [
        make_level_params(k_p1, visual_feat_dim[0], H, J),
        make_level_params(k_p2, visual_feat_dim[1], H, J),
        make_level_params(k_p3, visual_feat_dim[2], H, J),
    ]

    # one-time block-diagonal weight packing (hoisted off the per-call path)
    packed = pack_video_params(params, visual_feat_dim, H, J)

    feas_1, feas_2, feas_3 = video_multilevel_encode(videos, lengths, packed)
    jax.block_until_ready(feas_3[-1])

    # correctness vs the f32 reference; tolerance reflects the bf16 streamed x
    # and bf16 MXU operands used by the kernel (outputs are unit-normalized).
    ref_1, ref_2, ref_3 = reference_forward(videos, lengths, params)
    for got, ref in zip((feas_1, feas_2, feas_3), (ref_1, ref_2, ref_3)):
        for g, r in zip(got, ref):
            np.testing.assert_allclose(np.asarray(g), np.asarray(r),
                                       rtol=2e-2, atol=2e-2)

    print("KERNEL_OK")
</pallas_src>

<mosaic_0001>
module attributes {stable_mosaic.version = 11 : i64} {
  func.func @_fused_kernel(%arg0: i32, %arg1: memref<8x16x1xf32, #tpu.memory_space<vmem>>, %arg2: memref<8x16x128xbf16, #tpu.memory_space<vmem>>, %arg3: memref<128x128xbf16, #tpu.memory_space<vmem>>, %arg4: memref<1x128xf32, #tpu.memory_space<vmem>>, %arg5: memref<128x256xbf16, #tpu.memory_space<vmem>>, %arg6: memref<1x256xf32, #tpu.memory_space<vmem>>, %arg7: memref<256x256xf32, #tpu.memory_space<vmem>>, %arg8: memref<16x256xf32, #tpu.memory_space<vmem>>) attributes {dimension_semantics = [#tpu.dimension_semantics<parallel>], iteration_bounds = array<i64: 1>, scalar_prefetch = 0 : i64, scratch_operands = 0 : i64, tpu.core_type = #tpu.core_type<tc>, window_params = [{transform_indices = @transform_0, window_bounds = array<i64: 8, 16, 1>}, {transform_indices = @transform_1, window_bounds = array<i64: 8, 16, 128>}, {pipeline_mode = #tpu.pipeline_mode<synchronous>, transform_indices = @transform_2, window_bounds = array<i64: 128, 128>}, {pipeline_mode = #tpu.pipeline_mode<synchronous>, transform_indices = @transform_3, window_bounds = array<i64: 1, 128>}, {pipeline_mode = #tpu.pipeline_mode<synchronous>, transform_indices = @transform_4, window_bounds = array<i64: 128, 256>}, {pipeline_mode = #tpu.pipeline_mode<synchronous>, transform_indices = @transform_5, window_bounds = array<i64: 1, 256>}, {pipeline_mode = #tpu.pipeline_mode<synchronous>, transform_indices = @transform_6, window_bounds = array<i64: 256, 256>}, {transform_indices = @transform_7, window_bounds = array<i64: 16, 256>}]} {
    %c0 = arith.constant 0 : index
    %c0_0 = arith.constant 0 : index
    %c0_1 = arith.constant 0 : index
    %0 = vector.load %arg2[%c0, %c0_0, %c0_1] : memref<8x16x128xbf16, #tpu.memory_space<vmem>>, vector<1x16x128xbf16>
    %1 = vector.shape_cast %0 : vector<1x16x128xbf16> to vector<16x128xbf16>
    %2 = arith.extf %1 : vector<16x128xbf16> to vector<16x128xf32>
    %c0_2 = arith.constant 0 : index
    %c0_3 = arith.constant 0 : index
    %c0_4 = arith.constant 0 : index
    %3 = vector.load %arg1[%c0_2, %c0_3, %c0_4] : memref<8x16x1xf32, #tpu.memory_space<vmem>>, vector<1x16x1xf32>
    %4 = vector.shape_cast %3 : vector<1x16x1xf32> to vector<16x1xf32>
    %5 = vector.broadcast %4 : vector<16x1xf32> to vector<16x128xf32>
    %6 = arith.mulf %2, %5 : vector<16x128xf32>
    %c1 = arith.constant 1 : index
    %c0_5 = arith.constant 0 : index
    %c0_6 = arith.constant 0 : index
    %7 = vector.load %arg2[%c1, %c0_5, %c0_6] : memref<8x16x128xbf16, #tpu.memory_space<vmem>>, vector<1x16x128xbf16>
    %8 = vector.shape_cast %7 : vector<1x16x128xbf16> to vector<16x128xbf16>
    %9 = arith.extf %8 : vector<16x128xbf16> to vector<16x128xf32>
    %c1_7 = arith.constant 1 : index
    %c0_8 = arith.constant 0 : index
    %c0_9 = arith.constant 0 : index
    %10 = vector.load %arg1[%c1_7, %c0_8, %c0_9] : memref<8x16x1xf32, #tpu.memory_space<vmem>>, vector<1x16x1xf32>
    %11 = vector.shape_cast %10 : vector<1x16x1xf32> to vector<16x1xf32>
    %12 = vector.broadcast %11 : vector<16x1xf32> to vector<16x128xf32>
    %13 = arith.mulf %9, %12 : vector<16x128xf32>
    %14 = arith.addf %6, %13 : vector<16x128xf32>
    %c2 = arith.constant 2 : index
    %c0_10 = arith.constant 0 : index
    %c0_11 = arith.constant 0 : index
    %15 = vector.load %arg2[%c2, %c0_10, %c0_11] : memref<8x16x128xbf16, #tpu.memory_space<vmem>>, vector<1x16x128xbf16>
    %16 = vector.shape_cast %15 : vector<1x16x128xbf16> to vector<16x128xbf16>
    %17 = arith.extf %16 : vector<16x128xbf16> to vector<16x128xf32>
    %c2_12 = arith.constant 2 : index
    %c0_13 = arith.constant 0 : index
    %c0_14 = arith.constant 0 : index
    %18 = vector.load %arg1[%c2_12, %c0_13, %c0_14] : memref<8x16x1xf32, #tpu.memory_space<vmem>>, vector<1x16x1xf32>
    %19 = vector.shape_cast %18 : vector<1x16x1xf32> to vector<16x1xf32>
    %20 = vector.broadcast %19 : vector<16x1xf32> to vector<16x128xf32>
    %21 = arith.mulf %17, %20 : vector<16x128xf32>
    %22 = arith.addf %14, %21 : vector<16x128xf32>
    %c3 = arith.constant 3 : index
    %c0_15 = arith.constant 0 : index
    %c0_16 = arith.constant 0 : index
    %23 = vector.load %arg2[%c3, %c0_15, %c0_16] : memref<8x16x128xbf16, #tpu.memory_space<vmem>>, vector<1x16x128xbf16>
    %24 = vector.shape_cast %23 : vector<1x16x128xbf16> to vector<16x128xbf16>
    %25 = arith.extf %24 : vector<16x128xbf16> to vector<16x128xf32>
    %c3_17 = arith.constant 3 : index
    %c0_18 = arith.constant 0 : index
    %c0_19 = arith.constant 0 : index
    %26 = vector.load %arg1[%c3_17, %c0_18, %c0_19] : memref<8x16x1xf32, #tpu.memory_space<vmem>>, vector<1x16x1xf32>
    %27 = vector.shape_cast %26 : vector<1x16x1xf32> to vector<16x1xf32>
    %28 = vector.broadcast %27 : vector<16x1xf32> to vector<16x128xf32>
    %29 = arith.mulf %25, %28 : vector<16x128xf32>
    %30 = arith.addf %22, %29 : vector<16x128xf32>
    %c4 = arith.constant 4 : index
    %c0_20 = arith.constant 0 : index
    %c0_21 = arith.constant 0 : index
    %31 = vector.load %arg2[%c4, %c0_20, %c0_21] : memref<8x16x128xbf16, #tpu.memory_space<vmem>>, vector<1x16x128xbf16>
    %32 = vector.shape_cast %31 : vector<1x16x128xbf16> to vector<16x128xbf16>
    %33 = arith.extf %32 : vector<16x128xbf16> to vector<16x128xf32>
    %c4_22 = arith.constant 4 : index
    %c0_23 = arith.constant 0 : index
    %c0_24 = arith.constant 0 : index
    %34 = vector.load %arg1[%c4_22, %c0_23, %c0_24] : memref<8x16x1xf32, #tpu.memory_space<vmem>>, vector<1x16x1xf32>
    %35 = vector.shape_cast %34 : vector<1x16x1xf32> to vector<16x1xf32>
    %36 = vector.broadcast %35 : vector<16x1xf32> to vector<16x128xf32>
    %37 = arith.mulf %33, %36 : vector<16x128xf32>
    %38 = arith.addf %30, %37 : vector<16x128xf32>
    %c5 = arith.constant 5 : index
    %c0_25 = arith.constant 0 : index
    %c0_26 = arith.constant 0 : index
    %39 = vector.load %arg2[%c5, %c0_25, %c0_26] : memref<8x16x128xbf16, #tpu.memory_space<vmem>>, vector<1x16x128xbf16>
    %40 = vector.shape_cast %39 : vector<1x16x128xbf16> to vector<16x128xbf16>
    %41 = arith.extf %40 : vector<16x128xbf16> to vector<16x128xf32>
    %c5_27 = arith.constant 5 : index
    %c0_28 = arith.constant 0 : index
    %c0_29 = arith.constant 0 : index
    %42 = vector.load %arg1[%c5_27, %c0_28, %c0_29] : memref<8x16x1xf32, #tpu.memory_space<vmem>>, vector<1x16x1xf32>
    %43 = vector.shape_cast %42 : vector<1x16x1xf32> to vector<16x1xf32>
    %44 = vector.broadcast %43 : vector<16x1xf32> to vector<16x128xf32>
    %45 = arith.mulf %41, %44 : vector<16x128xf32>
    %46 = arith.addf %38, %45 : vector<16x128xf32>
    %c6 = arith.constant 6 : index
    %c0_30 = arith.constant 0 : index
    %c0_31 = arith.constant 0 : index
    %47 = vector.load %arg2[%c6, %c0_30, %c0_31] : memref<8x16x128xbf16, #tpu.memory_space<vmem>>, vector<1x16x128xbf16>
    %48 = vector.shape_cast %47 : vector<1x16x128xbf16> to vector<16x128xbf16>
    %49 = arith.extf %48 : vector<16x128xbf16> to vector<16x128xf32>
    %c6_32 = arith.constant 6 : index
    %c0_33 = arith.constant 0 : index
    %c0_34 = arith.constant 0 : index
    %50 = vector.load %arg1[%c6_32, %c0_33, %c0_34] : memref<8x16x1xf32, #tpu.memory_space<vmem>>, vector<1x16x1xf32>
    %51 = vector.shape_cast %50 : vector<1x16x1xf32> to vector<16x1xf32>
    %52 = vector.broadcast %51 : vector<16x1xf32> to vector<16x128xf32>
    %53 = arith.mulf %49, %52 : vector<16x128xf32>
    %54 = arith.addf %46, %53 : vector<16x128xf32>
    %c7 = arith.constant 7 : index
    %c0_35 = arith.constant 0 : index
    %c0_36 = arith.constant 0 : index
    %55 = vector.load %arg2[%c7, %c0_35, %c0_36] : memref<8x16x128xbf16, #tpu.memory_space<vmem>>, vector<1x16x128xbf16>
    %56 = vector.shape_cast %55 : vector<1x16x128xbf16> to vector<16x128xbf16>
    %57 = arith.extf %56 : vector<16x128xbf16> to vector<16x128xf32>
    %c7_37 = arith.constant 7 : index
    %c0_38 = arith.constant 0 : index
    %c0_39 = arith.constant 0 : index
    %58 = vector.load %arg1[%c7_37, %c0_38, %c0_39] : memref<8x16x1xf32, #tpu.memory_space<vmem>>, vector<1x16x1xf32>
    %59 = vector.shape_cast %58 : vector<1x16x1xf32> to vector<16x1xf32>
    %60 = vector.broadcast %59 : vector<16x1xf32> to vector<16x128xf32>
    %61 = arith.mulf %57, %60 : vector<16x128xf32>
    %62 = arith.addf %54, %61 : vector<16x128xf32>
    %63 = arith.truncf %62 : vector<16x128xf32> to vector<16x128xbf16>
    %c0_40 = arith.constant 0 : index
    %c0_41 = arith.constant 0 : index
    %64 = vector.load %arg3[%c0_40, %c0_41] : memref<128x128xbf16, #tpu.memory_space<vmem>>, vector<128x128xbf16>
    %cst = arith.constant dense<0.000000e+00> : vector<16x128xf32>
    %65 = tpu.matmul %63, %64, %cst {dimension_numbers = #tpu.dot_dimension_numbers<[1], [0], [0], [1], [0, 0, 1, 1], [], []>} : vector<16x128xbf16>, vector<128x128xbf16>, vector<16x128xf32> -> vector<16x128xf32>
    %c0_42 = arith.constant 0 : index
    %c0_43 = arith.constant 0 : index
    %66 = vector.load %arg4[%c0_42, %c0_43] : memref<1x128xf32, #tpu.memory_space<vmem>>, vector<1x128xf32>
    %67 = vector.broadcast %66 : vector<1x128xf32> to vector<16x128xf32>
    %68 = arith.addf %65, %67 : vector<16x128xf32>
    %69 = math.tanh %68 : vector<16x128xf32>
    %70 = arith.truncf %69 : vector<16x128xf32> to vector<16x128xbf16>
    %c0_44 = arith.constant 0 : index
    %c0_45 = arith.constant 0 : index
    %71 = vector.load %arg5[%c0_44, %c0_45] : memref<128x256xbf16, #tpu.memory_space<vmem>>, vector<128x256xbf16>
    %cst_46 = arith.constant dense<0.000000e+00> : vector<16x256xf32>
    %72 = tpu.matmul %70, %71, %cst_46 {dimension_numbers = #tpu.dot_dimension_numbers<[1], [0], [0], [1], [0, 0, 1, 1], [], []>} : vector<16x128xbf16>, vector<128x256xbf16>, vector<16x256xf32> -> vector<16x256xf32>
    %c0_47 = arith.constant 0 : index
    %c0_48 = arith.constant 0 : index
    %73 = vector.load %arg6[%c0_47, %c0_48] : memref<1x256xf32, #tpu.memory_space<vmem>>, vector<1x256xf32>
    %74 = vector.broadcast %73 : vector<1x256xf32> to vector<16x256xf32>
    %75 = arith.addf %72, %74 : vector<16x256xf32>
    %76 = math.tanh %75 : vector<16x256xf32>
    %77 = arith.mulf %76, %76 : vector<16x256xf32>
    %c0_49 = arith.constant 0 : index
    %c0_50 = arith.constant 0 : index
    %78 = vector.load %arg7[%c0_49, %c0_50] : memref<256x256xf32, #tpu.memory_space<vmem>>, vector<256x256xf32>
    %cst_51 = arith.constant dense<0.000000e+00> : vector<16x256xf32>
    %79 = tpu.matmul %77, %78, %cst_51 {dimension_numbers = #tpu.dot_dimension_numbers<[1], [0], [0], [1], [0, 0, 1, 1], [], []>} : vector<16x256xf32>, vector<256x256xf32>, vector<16x256xf32> -> vector<16x256xf32>
    %80 = math.sqrt %79 : vector<16x256xf32>
    %cst_52 = arith.constant 1.000000e-10 : f32
    %81 = vector.broadcast %cst_52 : f32 to vector<16x256xf32>
    %82 = arith.addf %80, %81 : vector<16x256xf32>
    %83 = arith.divf %76, %82 : vector<16x256xf32>
    %c0_53 = arith.constant 0 : index
    %c0_54 = arith.constant 0 : index
    %84 = vector.load %arg8[%c0_53, %c0_54] : memref<16x256xf32, #tpu.memory_space<vmem>>, vector<16x256xf32>
    tpu.vector_store %arg8[%c0_53, %c0_54], %83 {strides = array<i32>} : memref<16x256xf32, #tpu.memory_space<vmem>>, vector<16x256xf32>,
    return
  }
  func.func @transform_0(%arg0: i32) -> (i32, i32, i32) {
    %c0_i32 = arith.constant 0 : i32
    %c0_i32_0 = arith.constant 0 : i32
    %c0_i32_1 = arith.constant 0 : i32
    return %c0_i32, %arg0, %c0_i32_0 : i32, i32, i32
  }
  func.func @transform_1(%arg0: i32) -> (i32, i32, i32) {
    %c0_i32 = arith.constant 0 : i32
    %c0_i32_0 = arith.constant 0 : i32
    %c0_i32_1 = arith.constant 0 : i32
    return %c0_i32, %arg0, %c0_i32_0 : i32, i32, i32
  }
  func.func @transform_2(%arg0: i32) -> (i32, i32) {
    %c0_i32 = arith.constant 0 : i32
    %c0_i32_0 = arith.constant 0 : i32
    %c0_i32_1 = arith.constant 0 : i32
    return %c0_i32, %c0_i32_0 : i32, i32
  }
  func.func @transform_3(%arg0: i32) -> (i32, i32) {
    %c0_i32 = arith.constant 0 : i32
    %c0_i32_0 = arith.constant 0 : i32
    %c0_i32_1 = arith.constant 0 : i32
    return %c0_i32, %c0_i32_0 : i32, i32
  }
  func.func @transform_4(%arg0: i32) -> (i32, i32) {
    %c0_i32 = arith.constant 0 : i32
    %c0_i32_0 = arith.constant 0 : i32
    %c0_i32_1 = arith.constant 0 : i32
    return %c0_i32, %c0_i32_0 : i32, i32
  }
  func.func @transform_5(%arg0: i32) -> (i32, i32) {
    %c0_i32 = arith.constant 0 : i32
    %c0_i32_0 = arith.constant 0 : i32
    %c0_i32_1 = arith.constant 0 : i32
    return %c0_i32, %c0_i32_0 : i32, i32
  }
  func.func @transform_6(%arg0: i32) -> (i32, i32) {
    %c0_i32 = arith.constant 0 : i32
    %c0_i32_0 = arith.constant 0 : i32
    %c0_i32_1 = arith.constant 0 : i32
    return %c0_i32, %c0_i32_0 : i32, i32
  }
  func.func @transform_7(%arg0: i32) -> (i32, i32) {
    %c0_i32 = arith.constant 0 : i32
    %c0_i32_0 = arith.constant 0 : i32
    return %arg0, %c0_i32 : i32, i32
  }
}

</mosaic_0001>

<llo_original>
// kernel: tpu_custom_call.1
$region0: #{tpu_custom_call.1}
  #allocation0 [shape = 'u32[]', space=smem, size = 0x4, offset = 0x4, fixed_abs, tag = 'smem constant byte address 0x4 - core index']
  #allocation1 [shape = 'u32[72,128]{1,0:T(1,128)}', space=vmem, size = 0x9000, scoped, tag = 'internal scratch']
  %s0 = inlined_call_operand.vmem [shape: f32[8,16,1], index: 0, kind: input, shape index: {}]
  %s1 = inlined_call_operand.hbm [shape: bf16[8,16,128], index: 1, kind: input, shape index: {}]
  %s2 = inlined_call_operand.hbm [shape: bf16[128,128], index: 2, kind: input, shape index: {}]
  %s3 = inlined_call_operand.vmem [shape: f32[1,128], index: 3, kind: input, shape index: {}]
  %s4 = inlined_call_operand.vmem [shape: bf16[128,256], index: 4, kind: input, shape index: {}]
  %s5 = inlined_call_operand.vmem [shape: f32[1,256], index: 5, kind: input, shape index: {}]
  %s6 = inlined_call_operand.hbm [shape: f32[256,256], index: 6, kind: input, shape index: {}]
  %s7 = inlined_call_operand.hbm [shape: f32[16,256], index: 7, kind: output, shape index: {}]
  %s8 = sld [smem:[#allocation0]]
  $region50: #{tpu_custom_call.1} parent=0
    _
  %s10 = ssub.s32 1, %s8
  %s11 = scalar_select 0, %s10, %s8
  $region1: #{tpu_custom_call.1} parent=0
    #allocation2 [shape = 'u8[32768]{0}', space=vmem, size = 0x8000, scoped, tag = 'input window, operand 1, single buffered']
    #allocation3 [shape = 's32[1]{0}', space=sflag, size = 0x4, scoped, tag = 'scoped memory for tpu_custom_call.1']
    #allocation4 [shape = 's32[1]{0}', space=sflag, size = 0x4, scoped, tag = 'scoped memory for tpu_custom_call.1']
    #allocation5 [shape = 'u8[32768]{0}', space=vmem, size = 0x8000, scoped, tag = 'input window, operand 2, single buffered']
    #allocation6 [shape = 's32[1]{0}', space=sflag, size = 0x4, scoped, tag = 'scoped memory for tpu_custom_call.1']
    #allocation7 [shape = 'u8[262144]{0}', space=vmem, size = 0x40000, scoped, tag = 'input window, operand 6, single buffered']
    #allocation8 [shape = 'u8[16384]{0}', space=vmem, size = 0x4000, scoped, tag = 'output window, operand 0, single buffered']
    %12 = vsyncpa [#allocation3], 0
    %13 = vsyncpa [#allocation6], 0
    %14 = vsyncpa [#allocation4], 0
    // Predicated region
    $region2: #{tpu_custom_call.1} parent=1 // pred_check
      _
    $region3: #{tpu_custom_call.1} parent=1 // pred_check_branch
      %16 = sbr.rel (0) target = $region5
    $region4: #{tpu_custom_call.1} parent=1 // pred_region
      _
    $region5: #{tpu_custom_call.1} parent=1 // pred_fallthru
      _
    // Predicated region
    $region6: #{tpu_custom_call.1} parent=1 // pred_check
      _
    $region7: #{tpu_custom_call.1} parent=1 // pred_check_branch
      %18 = sbr.rel (0) target = $region9
    $region8: #{tpu_custom_call.1} parent=1 // pred_region
      %20 = vsyncadd [#allocation3], 0
      %s21 = sshll.u32 %s1, 4
      %s22 = int_to_ptr.hbm [resolvable:$true] %s21
      %s23 = sshll.u32 [#allocation2], 4
      %s24 = int_to_ptr.vmem [resolvable:$true] %s23
      %29 = dma.hbm_to_vmem [thread:$0]  %s22, 1024, %s24, [#allocation3], 64, 64, 4
    $region9: #{tpu_custom_call.1} parent=1 // pred_fallthru
      _
    // Predicated region
    $region10: #{tpu_custom_call.1} parent=1 // pred_check
      _
    $region11: #{tpu_custom_call.1} parent=1 // pred_check_branch
      %31 = sbr.rel (0) target = $region13
    $region12: #{tpu_custom_call.1} parent=1 // pred_region
      %33 = vsyncadd [#allocation6], 0
      %s34 = sshll.u32 %s2, 4
      %s35 = int_to_ptr.hbm [resolvable:$true] %s34
      %s36 = sshll.u32 [#allocation5], 4
      %s37 = int_to_ptr.vmem [resolvable:$true] %s36
      %42 = dma.hbm_to_vmem [thread:$0]  %s35, 1024, %s37, [#allocation6], 64, 64, 4
    $region13: #{tpu_custom_call.1} parent=1 // pred_fallthru
      _
    // Predicated region
    $region14: #{tpu_custom_call.1} parent=1 // pred_check
      _
    $region15: #{tpu_custom_call.1} parent=1 // pred_check_branch
      %44 = sbr.rel (0) target = $region17
    $region16: #{tpu_custom_call.1} parent=1 // pred_region
      _
    $region17: #{tpu_custom_call.1} parent=1 // pred_fallthru
      _
    // Predicated region
    $region18: #{tpu_custom_call.1} parent=1 // pred_check
      _
    $region19: #{tpu_custom_call.1} parent=1 // pred_check_branch
      %46 = sbr.rel (0) target = $region21
    $region20: #{tpu_custom_call.1} parent=1 // pred_region
      _
    $region21: #{tpu_custom_call.1} parent=1 // pred_fallthru
      _
    // Predicated region
    $region22: #{tpu_custom_call.1} parent=1 // pred_check
      _
    $region23: #{tpu_custom_call.1} parent=1 // pred_check_branch
      %48 = sbr.rel (0) target = $region25
    $region24: #{tpu_custom_call.1} parent=1 // pred_region
      _
    $region25: #{tpu_custom_call.1} parent=1 // pred_fallthru
      _
    // Predicated region
    $region26: #{tpu_custom_call.1} parent=1 // pred_check
      _
    $region27: #{tpu_custom_call.1} parent=1 // pred_check_branch
      %50 = sbr.rel (0) target = $region29
    $region28: #{tpu_custom_call.1} parent=1 // pred_region
      %52 = vsyncadd [#allocation6], 0
      %s53 = sshll.u32 %s6, 4
      %s54 = int_to_ptr.hbm [resolvable:$true] %s53
      %s55 = sshll.u32 [#allocation7], 4
      %s56 = int_to_ptr.vmem [resolvable:$true] %s55
      %61 = dma.hbm_to_vmem [thread:$0]  %s54, 8192, %s56, [#allocation6], 256, 256, 16
    $region29: #{tpu_custom_call.1} parent=1 // pred_fallthru
      _
    // Predicated region
    $region30: #{tpu_custom_call.1} parent=1 // pred_check
      _
    $region31: #{tpu_custom_call.1} parent=1 // pred_check_branch
      %63 = sbr.rel (0) target = $region33
    $region32: #{tpu_custom_call.1} parent=1 // pred_region
      %65 = dma.done [#allocation3], 1024
    $region33: #{tpu_custom_call.1} parent=1 // pred_fallthru
      _
    // Predicated region
    $region34: #{tpu_custom_call.1} parent=1 // pred_check
      _
    $region35: #{tpu_custom_call.1} parent=1 // pred_check_branch
      %67 = sbr.rel (0) target = $region37
    $region36: #{tpu_custom_call.1} parent=1 // pred_region
      %69 = dma.done [#allocation6], 1024
    $region37: #{tpu_custom_call.1} parent=1 // pred_fallthru
      _
    // Predicated region
    $region38: #{tpu_custom_call.1} parent=1 // pred_check
      _
    $region39: #{tpu_custom_call.1} parent=1 // pred_check_branch
      %71 = sbr.rel (0) target = $region41
    $region40: #{tpu_custom_call.1} parent=1 // pred_region
      %73 = dma.done [#allocation6], 8192
    $region41: #{tpu_custom_call.1} parent=1 // pred_fallthru
      _
    %v74 = vld [vmem:[#allocation2] sm:$0xf]
    %v75 = vld [vmem:[#allocation2 + $0x4] sm:$0xf]
    %v76 = vunpack.c.l.bf16 %v74
    %v77 = vunpack.c.l.bf16 %v75
    %v78 = vld [vmem:[%s0] sm:$0xff]
    %v79 = vld [vmem:[%s0 + $0x8] sm:$0xff]
    %81 = vset.pattern.permute.xlu0 0
    %82 = vperm.xlu0 %81, %v78
    %v83 = vpop.permute.xlu0 %82
    %86 = vset.pattern.permute.xlu0 0
    %87 = vperm.xlu0 %86, %v79
    %v88 = vpop.permute.xlu0 %87
    %v90 = vmul.f32 %v76, %v83
    %v91 = vmul.f32 %v77, %v88
    %s92 = scalar_lea.vmem [#allocation2], 8
    %v93 = vld [vmem:[%s92] sm:$0xf]
    %v94 = vld [vmem:[%s92 + $0x4] sm:$0xf]
    %v95 = vunpack.c.l.bf16 %v93
    %v96 = vunpack.c.l.bf16 %v94
    %s97 = scalar_lea.vmem %s0, 16
    %v98 = vld [vmem:[%s97] sm:$0xff]
    %v99 = vld [vmem:[%s97 + $0x8] sm:$0xff]
    %101 = vset.pattern.permute.xlu0 0
    %102 = vperm.xlu0 %101, %v98
    %v103 = vpop.permute.xlu0 %102
    %106 = vset.pattern.permute.xlu0 0
    %107 = vperm.xlu0 %106, %v99
    %v108 = vpop.permute.xlu0 %107
    %v110 = vmul.f32 %v95, %v103
    %v111 = vmul.f32 %v96, %v108
    %v112 = vadd.f32 %v90, %v110
    %v113 = vadd.f32 %v91, %v111
    %s114 = scalar_lea.vmem [#allocation2], 16
    %v115 = vld [vmem:[%s114] sm:$0xf]
    %v116 = vld [vmem:[%s114 + $0x4] sm:$0xf]
    %v117 = vunpack.c.l.bf16 %v115
    %v118 = vunpack.c.l.bf16 %v116
    %s119 = scalar_lea.vmem %s0, 32
    %v120 = vld [vmem:[%s119] sm:$0xff]
    %v121 = vld [vmem:[%s119 + $0x8] sm:$0xff]
    %123 = vset.pattern.permute.xlu0 0
    %124 = vperm.xlu0 %123, %v120
    %v125 = vpop.permute.xlu0 %124
    %128 = vset.pattern.permute.xlu0 0
    %129 = vperm.xlu0 %128, %v121
    %v130 = vpop.permute.xlu0 %129
    %v132 = vmul.f32 %v117, %v125
    %v133 = vmul.f32 %v118, %v130
    %v134 = vadd.f32 %v112, %v132
    %v135 = vadd.f32 %v113, %v133
    %s136 = scalar_lea.vmem [#allocation2], 24
    %v137 = vld [vmem:[%s136] sm:$0xf]
    %v138 = vld [vmem:[%s136 + $0x4] sm:$0xf]
    %v139 = vunpack.c.l.bf16 %v137
    %v140 = vunpack.c.l.bf16 %v138
    %s141 = scalar_lea.vmem %s0, 48
    %v142 = vld [vmem:[%s141] sm:$0xff]
    %v143 = vld [vmem:[%s141 + $0x8] sm:$0xff]
    %145 = vset.pattern.permute.xlu0 0
    %146 = vperm.xlu0 %145, %v142
    %v147 = vpop.permute.xlu0 %146
    %150 = vset.pattern.permute.xlu0 0
    %151 = vperm.xlu0 %150, %v143
    %v152 = vpop.permute.xlu0 %151
    %v154 = vmul.f32 %v139, %v147
    %v155 = vmul.f32 %v140, %v152
    %v156 = vadd.f32 %v134, %v154
    %v157 = vadd.f32 %v135, %v155
    %s158 = scalar_lea.vmem [#allocation2], 32
    %v159 = vld [vmem:[%s158] sm:$0xf]
    %v160 = vld [vmem:[%s158 + $0x4] sm:$0xf]
    %v161 = vunpack.c.l.bf16 %v159
    %v162 = vunpack.c.l.bf16 %v160
    %s163 = scalar_lea.vmem %s0, 64
    %v164 = vld [vmem:[%s163] sm:$0xff]
    %v165 = vld [vmem:[%s163 + $0x8] sm:$0xff]
    %167 = vset.pattern.permute.xlu0 0
    %168 = vperm.xlu0 %167, %v164
    %v169 = vpop.permute.xlu0 %168
    %172 = vset.pattern.permute.xlu0 0
    %173 = vperm.xlu0 %172, %v165
    %v174 = vpop.permute.xlu0 %173
    %v176 = vmul.f32 %v161, %v169
    %v177 = vmul.f32 %v162, %v174
    %v178 = vadd.f32 %v156, %v176
    %v179 = vadd.f32 %v157, %v177
    %s180 = scalar_lea.vmem [#allocation2], 40
    %v181 = vld [vmem:[%s180] sm:$0xf]
    %v182 = vld [vmem:[%s180 + $0x4] sm:$0xf]
    %v183 = vunpack.c.l.bf16 %v181
    %v184 = vunpack.c.l.bf16 %v182
    %s185 = scalar_lea.vmem %s0, 80
    %v186 = vld [vmem:[%s185] sm:$0xff]
    %v187 = vld [vmem:[%s185 + $0x8] sm:$0xff]
    %189 = vset.pattern.permute.xlu0 0
    %190 = vperm.xlu0 %189, %v186
    %v191 = vpop.permute.xlu0 %190
    %194 = vset.pattern.permute.xlu0 0
    %195 = vperm.xlu0 %194, %v187
    %v196 = vpop.permute.xlu0 %195
    %v198 = vmul.f32 %v183, %v191
    %v199 = vmul.f32 %v184, %v196
    %v200 = vadd.f32 %v178, %v198
    %v201 = vadd.f32 %v179, %v199
    %s202 = scalar_lea.vmem [#allocation2], 48
    %v203 = vld [vmem:[%s202] sm:$0xf]
    %v204 = vld [vmem:[%s202 + $0x4] sm:$0xf]
    %v205 = vunpack.c.l.bf16 %v203
    %v206 = vunpack.c.l.bf16 %v204
    %s207 = scalar_lea.vmem %s0, 96
    %v208 = vld [vmem:[%s207] sm:$0xff]
    %v209 = vld [vmem:[%s207 + $0x8] sm:$0xff]
    %211 = vset.pattern.permute.xlu0 0
    %212 = vperm.xlu0 %211, %v208
    %v213 = vpop.permute.xlu0 %212
    %216 = vset.pattern.permute.xlu0 0
    %217 = vperm.xlu0 %216, %v209
    %v218 = vpop.permute.xlu0 %217
    %v220 = vmul.f32 %v205, %v213
    %v221 = vmul.f32 %v206, %v218
    %v222 = vadd.f32 %v200, %v220
    %v223 = vadd.f32 %v201, %v221
    %s224 = scalar_lea.vmem [#allocation2], 56
    %v225 = vld [vmem:[%s224] sm:$0xf]
    %v226 = vld [vmem:[%s224 + $0x4] sm:$0xf]
    %v227 = vunpack.c.l.bf16 %v225
    %v228 = vunpack.c.l.bf16 %v226
    %s229 = scalar_lea.vmem %s0, 112
    %v230 = vld [vmem:[%s229] sm:$0xff]
    %v231 = vld [vmem:[%s229 + $0x8] sm:$0xff]
    %233 = vset.pattern.permute.xlu0 0
    %234 = vperm.xlu0 %233, %v230
    %v235 = vpop.permute.xlu0 %234
    %238 = vset.pattern.permute.xlu0 0
    %239 = vperm.xlu0 %238, %v231
    %v240 = vpop.permute.xlu0 %239
    %v242 = vmul.f32 %v227, %v235
    %v243 = vmul.f32 %v228, %v240
    %v244 = vadd.f32 %v222, %v242
    %v245 = vadd.f32 %v223, %v243
    %v246 = vpack.c.bf16 %v245, %v244
    %v247 = vld [vmem:[#allocation5] sm:$0xf]
    %v248 = vld [vmem:[#allocation5 + $0x4] sm:$0xf]
    %v249 = vld [vmem:[#allocation5 + $0x8] sm:$0xf]
    %v250 = vld [vmem:[#allocation5 + $0xc] sm:$0xf]
    %v251 = vld [vmem:[#allocation5 + $0x10] sm:$0xf]
    %v252 = vld [vmem:[#allocation5 + $0x14] sm:$0xf]
    %v253 = vld [vmem:[#allocation5 + $0x18] sm:$0xf]
    %v254 = vld [vmem:[#allocation5 + $0x1c] sm:$0xf]
    %v255 = vld [vmem:[#allocation5 + $0x20] sm:$0xf]
    %v256 = vld [vmem:[#allocation5 + $0x24] sm:$0xf]
    %v257 = vld [vmem:[#allocation5 + $0x28] sm:$0xf]
    %v258 = vld [vmem:[#allocation5 + $0x2c] sm:$0xf]
    %v259 = vld [vmem:[#allocation5 + $0x30] sm:$0xf]
    %v260 = vld [vmem:[#allocation5 + $0x34] sm:$0xf]
    %v261 = vld [vmem:[#allocation5 + $0x38] sm:$0xf]
    %v262 = vld [vmem:[#allocation5 + $0x3c] sm:$0xf]
    %v263 = vld [vmem:[%s3] sm:$0x1]
    %v265 = vperm.slane %v263, 0
    %v283 = vunpack.c.l.b16 %v247
    %v284 = vunpack.c.l.b16 %v248
    %v285 = vunpack.c.l.b16 %v249
    %v286 = vunpack.c.l.b16 %v250
    %v287 = vunpack.c.l.b16 %v251
    %v288 = vunpack.c.l.b16 %v252
    %v289 = vunpack.c.l.b16 %v253
    %v290 = vunpack.c.l.b16 %v254
    %v291 = vunpack.c.l.b16 %v255
    %v292 = vunpack.c.l.b16 %v256
    %v293 = vunpack.c.l.b16 %v257
    %v294 = vunpack.c.l.b16 %v258
    %v295 = vunpack.c.l.b16 %v259
    %v296 = vunpack.c.l.b16 %v260
    %v297 = vunpack.c.l.b16 %v261
    %v298 = vunpack.c.l.b16 %v262
    %v299 = vpack.c.b16 %v284, %v283
    %v300 = vpack.c.b16 %v286, %v285
    %v301 = vpack.c.b16 %v288, %v287
    %v302 = vpack.c.b16 %v290, %v289
    %v303 = vpack.c.b16 %v292, %v291
    %v304 = vpack.c.b16 %v294, %v293
    %v305 = vpack.c.b16 %v296, %v295
    %v306 = vpack.c.b16 %v298, %v297
    %315 = vmatpush.bf16.msra.mxu0 %v306
    %316 = vmatpush.bf16.msra.mxu0 %v305
    %317 = vmatpush.bf16.msra.mxu0 %v304
    %318 = vmatpush.bf16.msra.mxu0 %v303
    %319 = vmatpush.bf16.msra.mxu0 %v302
    %320 = vmatpush.bf16.msra.mxu0 %v301
    %321 = vmatpush.bf16.msra.mxu0 %v300
    %322 = vmatpush.bf16.msra.mxu0 %v299
    %323 = vmatmul.bf16.gmra.mxu0 %v246
    %v324 = vpop.f32.mrf.mxu0
    %v325 = vadd.f32 %v265, %v324
    %v326 = vpop.f32.mrf.mxu0
    %v327 = vadd.f32 %v265, %v326
    %328 = vdwg.mxu0
    %v329 = vtanh.pop %v325
    %v330 = vtanh.pop %v327
    %v331 = vpack.c.bf16 %v330, %v329
    %v332 = vld [vmem:[%s4] sm:$0xff]
    %v333 = vld [vmem:[%s4 + $0x8] sm:$0xff]
    %v334 = vld [vmem:[%s4 + $0x10] sm:$0xff]
    %v335 = vld [vmem:[%s4 + $0x18] sm:$0xff]
    %v336 = vld [vmem:[%s4 + $0x20] sm:$0xff]
    %v337 = vld [vmem:[%s4 + $0x28] sm:$0xff]
    %v338 = vld [vmem:[%s4 + $0x30] sm:$0xff]
    %v339 = vld [vmem:[%s4 + $0x38] sm:$0xff]
    %v340 = vld [vmem:[%s4 + $0x40] sm:$0xff]
    %v341 = vld [vmem:[%s4 + $0x48] sm:$0xff]
    %v342 = vld [vmem:[%s4 + $0x50] sm:$0xff]
    %v343 = vld [vmem:[%s4 + $0x58] sm:$0xff]
    %v344 = vld [vmem:[%s4 + $0x60] sm:$0xff]
    %v345 = vld [vmem:[%s4 + $0x68] sm:$0xff]
    %v346 = vld [vmem:[%s4 + $0x70] sm:$0xff]
    %v347 = vld [vmem:[%s4 + $0x78] sm:$0xff]
    %v348 = vld [vmem:[%s5] sm:$0x3]
    %v350 = vperm.slane %v348, 0
    %v351 = vperm.slane %v348, 1
    %v370 = vunpack.c.l.b16 %v332
    %v371 = vunpack.c.h.b16 %v332
    %v372 = vunpack.c.l.b16 %v333
    %v373 = vunpack.c.h.b16 %v333
    %v374 = vunpack.c.l.b16 %v334
    %v375 = vunpack.c.h.b16 %v334
    %v376 = vunpack.c.l.b16 %v335
    %v377 = vunpack.c.h.b16 %v335
    %v378 = vunpack.c.l.b16 %v336
    %v379 = vunpack.c.h.b16 %v336
    %v380 = vunpack.c.l.b16 %v337
    %v381 = vunpack.c.h.b16 %v337
    %v382 = vunpack.c.l.b16 %v338
    %v383 = vunpack.c.h.b16 %v338
    %v384 = vunpack.c.l.b16 %v339
    %v385 = vunpack.c.h.b16 %v339
    %v386 = vunpack.c.l.b16 %v340
    %v387 = vunpack.c.h.b16 %v340
    %v388 = vunpack.c.l.b16 %v341
    %v389 = vunpack.c.h.b16 %v341
    %v390 = vunpack.c.l.b16 %v342
    %v391 = vunpack.c.h.b16 %v342
    %v392 = vunpack.c.l.b16 %v343
    %v393 = vunpack.c.h.b16 %v343
    %v394 = vunpack.c.l.b16 %v344
    %v395 = vunpack.c.h.b16 %v344
    %v396 = vunpack.c.l.b16 %v345
    %v397 = vunpack.c.h.b16 %v345
    %v398 = vunpack.c.l.b16 %v346
    %v399 = vunpack.c.h.b16 %v346
    %v400 = vunpack.c.l.b16 %v347
    %v401 = vunpack.c.h.b16 %v347
    %v402 = vpack.c.b16 %v372, %v370
    %v403 = vpack.c.b16 %v373, %v371
    %v404 = vpack.c.b16 %v376, %v374
    %v405 = vpack.c.b16 %v377, %v375
    %v406 = vpack.c.b16 %v380, %v378
    %v407 = vpack.c.b16 %v381, %v379
    %v408 = vpack.c.b16 %v384, %v382
    %v409 = vpack.c.b16 %v385, %v383
    %v410 = vpack.c.b16 %v388, %v386
    %v411 = vpack.c.b16 %v389, %v387
    %v412 = vpack.c.b16 %v392, %v390
    %v413 = vpack.c.b16 %v393, %v391
    %v414 = vpack.c.b16 %v396, %v394
    %v415 = vpack.c.b16 %v397, %v395
    %v416 = vpack.c.b16 %v400, %v398
    %v417 = vpack.c.b16 %v401, %v399
    %434 = vmatpush.bf16.msra.mxu0 %v416
    %435 = vmatpush.bf16.msra.mxu0 %v414
    %436 = vmatpush.bf16.msra.mxu0 %v412
    %437 = vmatpush.bf16.msra.mxu0 %v410
    %438 = vmatpush.bf16.msra.mxu0 %v408
    %439 = vmatpush.bf16.msra.mxu0 %v406
    %440 = vmatpush.bf16.msra.mxu0 %v404
    %441 = vmatpush.bf16.msra.mxu0 %v402
    %442 = vmatmul.bf16.gmra.mxu0 %v331
    %v443 = vpop.f32.mrf.mxu0
    %v444 = vadd.f32 %v350, %v443
    %v445 = vpop.f32.mrf.mxu0
    %v446 = vadd.f32 %v350, %v445
    %447 = vdwg.mxu0
    %448 = vmatpush.bf16.msra.mxu0 %v417
    %449 = vmatpush.bf16.msra.mxu0 %v415
    %450 = vmatpush.bf16.msra.mxu0 %v413
    %451 = vmatpush.bf16.msra.mxu0 %v411
    %452 = vmatpush.bf16.msra.mxu0 %v409
    %453 = vmatpush.bf16.msra.mxu0 %v407
    %454 = vmatpush.bf16.msra.mxu0 %v405
    %455 = vmatpush.bf16.msra.mxu0 %v403
    %456 = vmatmul.bf16.gmra.mxu0 %v331
    %v457 = vpop.f32.mrf.mxu0
    %v458 = vadd.f32 %v351, %v457
    %v459 = vpop.f32.mrf.mxu0
    %v460 = vadd.f32 %v351, %v459
    %461 = vdwg.mxu0
    %v462 = vtanh.pop %v444
    %v463 = vtanh.pop %v458
    %v464 = vtanh.pop %v446
    %v465 = vtanh.pop %v460
    %v466 = vmul.f32 %v462, %v462
    %v467 = vmul.f32 %v463, %v463
    %v468 = vmul.f32 %v464, %v464
    %v469 = vmul.f32 %v465, %v465
    %v470 = vld [vmem:[#allocation7] sm:$0xff]
    %v471 = vld [vmem:[#allocation7 + $0x8] sm:$0xff]
    %v472 = vld [vmem:[#allocation7 + $0x10] sm:$0xff]
    %v473 = vld [vmem:[#allocation7 + $0x18] sm:$0xff]
    %v474 = vld [vmem:[#allocation7 + $0x20] sm:$0xff]
    %v475 = vld [vmem:[#allocation7 + $0x28] sm:$0xff]
    %v476 = vld [vmem:[#allocation7 + $0x30] sm:$0xff]
    %v477 = vld [vmem:[#allocation7 + $0x38] sm:$0xff]
    %v478 = vld [vmem:[#allocation7 + $0x40] sm:$0xff]
    %v479 = vld [vmem:[#allocation7 + $0x48] sm:$0xff]
    %v480 = vld [vmem:[#allocation7 + $0x50] sm:$0xff]
    %v481 = vld [vmem:[#allocation7 + $0x58] sm:$0xff]
    %v482 = vld [vmem:[#allocation7 + $0x60] sm:$0xff]
    %v483 = vld [vmem:[#allocation7 + $0x68] sm:$0xff]
    %v484 = vld [vmem:[#allocation7 + $0x70] sm:$0xff]
    %v485 = vld [vmem:[#allocation7 + $0x78] sm:$0xff]
    %v486 = vld [vmem:[#allocation7 + $0x80] sm:$0xff]
    %v487 = vld [vmem:[#allocation7 + $0x88] sm:$0xff]
    %v488 = vld [vmem:[#allocation7 + $0x90] sm:$0xff]
    %v489 = vld [vmem:[#allocation7 + $0x98] sm:$0xff]
    %v490 = vld [vmem:[#allocation7 + $0xa0] sm:$0xff]
    %v491 = vld [vmem:[#allocation7 + $0xa8] sm:$0xff]
    %v492 = vld [vmem:[#allocation7 + $0xb0] sm:$0xff]
    %v493 = vld [vmem:[#allocation7 + $0xb8] sm:$0xff]
    %v494 = vld [vmem:[#allocation7 + $0xc0] sm:$0xff]
    %v495 = vld [vmem:[#allocation7 + $0xc8] sm:$0xff]
    %v496 = vld [vmem:[#allocation7 + $0xd0] sm:$0xff]
    %v497 = vld [vmem:[#allocation7 + $0xd8] sm:$0xff]
    %v498 = vld [vmem:[#allocation7 + $0xe0] sm:$0xff]
    %v499 = vld [vmem:[#allocation7 + $0xe8] sm:$0xff]
    %v500 = vld [vmem:[#allocation7 + $0xf0] sm:$0xff]
    %v501 = vld [vmem:[#allocation7 + $0xf8] sm:$0xff]
    %v502 = vld [vmem:[#allocation7 + $0x100] sm:$0xff]
    %v503 = vld [vmem:[#allocation7 + $0x108] sm:$0xff]
    %v504 = vld [vmem:[#allocation7 + $0x110] sm:$0xff]
    %v505 = vld [vmem:[#allocation7 + $0x118] sm:$0xff]
    %v506 = vld [vmem:[#allocation7 + $0x120] sm:$0xff]
    %v507 = vld [vmem:[#allocation7 + $0x128] sm:$0xff]
    %v508 = vld [vmem:[#allocation7 + $0x130] sm:$0xff]
    %v509 = vld [vmem:[#allocation7 + $0x138] sm:$0xff]
    %v510 = vld [vmem:[#allocation7 + $0x140] sm:$0xff]
    %v511 = vld [vmem:[#allocation7 + $0x148] sm:$0xff]
    %v512 = vld [vmem:[#allocation7 + $0x150] sm:$0xff]
    %v513 = vld [vmem:[#allocation7 + $0x158] sm:$0xff]
    %v514 = vld [vmem:[#allocation7 + $0x160] sm:$0xff]
    %v515 = vld [vmem:[#allocation7 + $0x168] sm:$0xff]
    %v516 = vld [vmem:[#allocation7 + $0x170] sm:$0xff]
    %v517 = vld [vmem:[#allocation7 + $0x178] sm:$0xff]
    %v518 = vld [vmem:[#allocation7 + $0x180] sm:$0xff]
    %v519 = vld [vmem:[#allocation7 + $0x188] sm:$0xff]
    %v520 = vld [vmem:[#allocation7 + $0x190] sm:$0xff]
    %v521 = vld [vmem:[#allocation7 + $0x198] sm:$0xff]
    %v522 = vld [vmem:[#allocation7 + $0x1a0] sm:$0xff]
    %v523 = vld [vmem:[#allocation7 + $0x1a8] sm:$0xff]
    %v524 = vld [vmem:[#allocation7 + $0x1b0] sm:$0xff]
    %v525 = vld [vmem:[#allocation7 + $0x1b8] sm:$0xff]
    %v526 = vld [vmem:[#allocation7 + $0x1c0] sm:$0xff]
    %v527 = vld [vmem:[#allocation7 + $0x1c8] sm:$0xff]
    %v528 = vld [vmem:[#allocation7 + $0x1d0] sm:$0xff]
    %v529 = vld [vmem:[#allocation7 + $0x1d8] sm:$0xff]
    %v530 = vld [vmem:[#allocation7 + $0x1e0] sm:$0xff]
    %v531 = vld [vmem:[#allocation7 + $0x1e8] sm:$0xff]
    %v532 = vld [vmem:[#allocation7 + $0x1f0] sm:$0xff]
    %v533 = vld [vmem:[#allocation7 + $0x1f8] sm:$0xff]
    %534 = vmatpush.msra.mxu0 %v500
    %535 = vmatpush.msra.mxu0 %v498
    %536 = vmatpush.msra.mxu0 %v496
    %537 = vmatpush.msra.mxu0 %v494
    %538 = vmatpush.msra.mxu0 %v492
    %539 = vmatpush.msra.mxu0 %v490
    %540 = vmatpush.msra.mxu0 %v488
    %541 = vmatpush.msra.mxu0 %v486
    %542 = vmatpush.msra.mxu0 %v484
    %543 = vmatpush.msra.mxu0 %v482
    %544 = vmatpush.msra.mxu0 %v480
    %545 = vmatpush.msra.mxu0 %v478
    %546 = vmatpush.msra.mxu0 %v476
    %547 = vmatpush.msra.mxu0 %v474
    %548 = vmatpush.msra.mxu0 %v472
    %549 = vmatpush.msra.mxu0 %v470
    %550 = vmatmul.f32.gmra.mxu0 %v466
    %v551 = vpop.f32.mrf.mxu0
    %v552 = vadd.f32 0.0, %v551
    %553 = vmatmul.f32.gmra.mxu0 %v468
    %v554 = vpop.f32.mrf.mxu0
    %v555 = vadd.f32 0.0, %v554
    %556 = vdwg.mxu0
    %557 = vmatpush.msra.mxu0 %v532
    %558 = vmatpush.msra.mxu0 %v530
    %559 = vmatpush.msra.mxu0 %v528
    %560 = vmatpush.msra.mxu0 %v526
    %561 = vmatpush.msra.mxu0 %v524
    %562 = vmatpush.msra.mxu0 %v522
    %563 = vmatpush.msra.mxu0 %v520
    %564 = vmatpush.msra.mxu0 %v518
    %565 = vmatpush.msra.mxu0 %v516
    %566 = vmatpush.msra.mxu0 %v514
    %567 = vmatpush.msra.mxu0 %v512
    %568 = vmatpush.msra.mxu0 %v510
    %569 = vmatpush.msra.mxu0 %v508
    %570 = vmatpush.msra.mxu0 %v506
    %571 = vmatpush.msra.mxu0 %v504
    %572 = vmatpush.msra.mxu0 %v502
    %573 = vmatmul.f32.gmra.mxu0 %v467
    %v574 = vpop.f32.mrf.mxu0
    %v575 = vadd.f32 %v552, %v574
    %576 = vmatmul.f32.gmra.mxu0 %v469
    %v577 = vpop.f32.mrf.mxu0
    %v578 = vadd.f32 %v555, %v577
    %579 = vdwg.mxu0
    %580 = vmatpush.msra.mxu0 %v501
    %581 = vmatpush.msra.mxu0 %v499
    %582 = vmatpush.msra.mxu0 %v497
    %583 = vmatpush.msra.mxu0 %v495
    %584 = vmatpush.msra.mxu0 %v493
    %585 = vmatpush.msra.mxu0 %v491
    %586 = vmatpush.msra.mxu0 %v489
    %587 = vmatpush.msra.mxu0 %v487
    %588 = vmatpush.msra.mxu0 %v485
    %589 = vmatpush.msra.mxu0 %v483
    %590 = vmatpush.msra.mxu0 %v481
    %591 = vmatpush.msra.mxu0 %v479
    %592 = vmatpush.msra.mxu0 %v477
    %593 = vmatpush.msra.mxu0 %v475
    %594 = vmatpush.msra.mxu0 %v473
    %595 = vmatpush.msra.mxu0 %v471
    %596 = vmatmul.f32.gmra.mxu0 %v466
    %v597 = vpop.f32.mrf.mxu0
    %v598 = vadd.f32 0.0, %v597
    %599 = vmatmul.f32.gmra.mxu0 %v468
    %v600 = vpop.f32.mrf.mxu0
    %v601 = vadd.f32 0.0, %v600
    %602 = vdwg.mxu0
    %603 = vmatpush.msra.mxu0 %v533
    %604 = vmatpush.msra.mxu0 %v531
    %605 = vmatpush.msra.mxu0 %v529
    %606 = vmatpush.msra.mxu0 %v527
    %607 = vmatpush.msra.mxu0 %v525
    %608 = vmatpush.msra.mxu0 %v523
    %609 = vmatpush.msra.mxu0 %v521
    %610 = vmatpush.msra.mxu0 %v519
    %611 = vmatpush.msra.mxu0 %v517
    %612 = vmatpush.msra.mxu0 %v515
    %613 = vmatpush.msra.mxu0 %v513
    %614 = vmatpush.msra.mxu0 %v511
    %615 = vmatpush.msra.mxu0 %v509
    %616 = vmatpush.msra.mxu0 %v507
    %617 = vmatpush.msra.mxu0 %v505
    %618 = vmatpush.msra.mxu0 %v503
    %619 = vmatmul.f32.gmra.mxu0 %v467
    %v620 = vpop.f32.mrf.mxu0
    %v621 = vadd.f32 %v598, %v620
    %622 = vmatmul.f32.gmra.mxu0 %v469
    %v623 = vpop.f32.mrf.mxu0
    %v624 = vadd.f32 %v601, %v623
    %625 = vdwg.mxu0
    %v626 = vrsqrt.pop %v575
    %v627 = vmul.f32 %v626, %v575
    %v628 = vmul.f32 %v627, %v626
    %v629 = vmul.f32 0.5, %v628
    %v630 = vsub.f32 1.5, %v629
    %v631 = vmul.f32 %v626, %v630
    %v632 = vmul.f32 %v575, %v631
    %vm633 = vcmp.eq.f32.partialorder %v575, inf
    %v634 = vsel %vm633, %v575, %v632
    %vm635 = vcmp.eq.f32.partialorder %v575, 0.0
    %v636 = vand.u32 %v575, 2147483648
    %v637 = vsel %vm635, %v636, %v634
    %v638 = vrsqrt.pop %v621
    %v639 = vmul.f32 %v638, %v621
    %v640 = vmul.f32 %v639, %v638
    %v641 = vmul.f32 0.5, %v640
    %v642 = vsub.f32 1.5, %v641
    %v643 = vmul.f32 %v638, %v642
    %v644 = vmul.f32 %v621, %v643
    %vm645 = vcmp.eq.f32.partialorder %v621, inf
    %v646 = vsel %vm645, %v621, %v644
    %vm647 = vcmp.eq.f32.partialorder %v621, 0.0
    %v648 = vand.u32 %v621, 2147483648
    %v649 = vsel %vm647, %v648, %v646
    %v650 = vrsqrt.pop %v578
    %v651 = vmul.f32 %v650, %v578
    %v652 = vmul.f32 %v651, %v650
    %v653 = vmul.f32 0.5, %v652
    %v654 = vsub.f32 1.5, %v653
    %v655 = vmul.f32 %v650, %v654
    %v656 = vmul.f32 %v578, %v655
    %vm657 = vcmp.eq.f32.partialorder %v578, inf
    %v658 = vsel %vm657, %v578, %v656
    %vm659 = vcmp.eq.f32.partialorder %v578, 0.0
    %v660 = vand.u32 %v578, 2147483648
    %v661 = vsel %vm659, %v660, %v658
    %v662 = vrsqrt.pop %v624
    %v663 = vmul.f32 %v662, %v624
    %v664 = vmul.f32 %v663, %v662
    %v665 = vmul.f32 0.5, %v664
    %v666 = vsub.f32 1.5, %v665
    %v667 = vmul.f32 %v662, %v666
    %v668 = vmul.f32 %v624, %v667
    %vm669 = vcmp.eq.f32.partialorder %v624, inf
    %v670 = vsel %vm669, %v624, %v668
    %vm671 = vcmp.eq.f32.partialorder %v624, 0.0
    %v672 = vand.u32 %v624, 2147483648
    %v673 = vsel %vm671, %v672, %v670
    %v674 = vadd.f32 %v637, 1e-10
    %v675 = vadd.f32 %v649, 1e-10
    %v676 = vadd.f32 %v661, 1e-10
    %v677 = vadd.f32 %v673, 1e-10
    %v678 = vrcp.pop %v674
    %v679 = vmul.f32 %v674, %v678
    %v680 = vsub.f32 1.0, %v679
    %v681 = vmul.f32 %v678, %v680
    %v682 = vadd.f32 %v678, %v681
    %vm683 = vweird.f32 %v674
    %vm684 = vweird.f32 %v678
    %vm685 = vmor %vm683, %vm684
    %v686 = vsel %vm685, %v678, %v682
    %v687 = vand.u32 2147483647, %v674
    %vm688 = vcmp.eq.f32.partialorder %v687, 8.507059e+37
    %v689 = vand.u32 %v674, 2147483648
    %v690 = vor.u32 1.1754944e-38, %v689
    %v691 = vsel %vm688, %v690, %v686
    %v692 = vmul.f32 %v462, %v691
    %v693 = vrcp.pop %v675
    %v694 = vmul.f32 %v675, %v693
    %v695 = vsub.f32 1.0, %v694
    %v696 = vmul.f32 %v693, %v695
    %v697 = vadd.f32 %v693, %v696
    %vm698 = vweird.f32 %v675
    %vm699 = vweird.f32 %v693
    %vm700 = vmor %vm698, %vm699
    %v701 = vsel %vm700, %v693, %v697
    %v702 = vand.u32 2147483647, %v675
    %vm703 = vcmp.eq.f32.partialorder %v702, 8.507059e+37
    %v704 = vand.u32 %v675, 2147483648
    %v705 = vor.u32 1.1754944e-38, %v704
    %v706 = vsel %vm703, %v705, %v701
    %v707 = vmul.f32 %v463, %v706
    %v708 = vrcp.pop %v676
    %v709 = vmul.f32 %v676, %v708
    %v710 = vsub.f32 1.0, %v709
    %v711 = vmul.f32 %v708, %v710
    %v712 = vadd.f32 %v708, %v711
    %vm713 = vweird.f32 %v676
    %vm714 = vweird.f32 %v708
    %vm715 = vmor %vm713, %vm714
    %v716 = vsel %vm715, %v708, %v712
    %v717 = vand.u32 2147483647, %v676
    %vm718 = vcmp.eq.f32.partialorder %v717, 8.507059e+37
    %v719 = vand.u32 %v676, 2147483648
    %v720 = vor.u32 1.1754944e-38, %v719
    %v721 = vsel %vm718, %v720, %v716
    %v722 = vmul.f32 %v464, %v721
    %v723 = vrcp.pop %v677
    %v724 = vmul.f32 %v677, %v723
    %v725 = vsub.f32 1.0, %v724
    %v726 = vmul.f32 %v723, %v725
    %v727 = vadd.f32 %v723, %v726
    %vm728 = vweird.f32 %v677
    %vm729 = vweird.f32 %v723
    %vm730 = vmor %vm728, %vm729
    %v731 = vsel %vm730, %v723, %v727
    %v732 = vand.u32 2147483647, %v677
    %vm733 = vcmp.eq.f32.partialorder %v732, 8.507059e+37
    %v734 = vand.u32 %v677, 2147483648
    %v735 = vor.u32 1.1754944e-38, %v734
    %v736 = vsel %vm733, %v735, %v731
    %v737 = vmul.f32 %v465, %v736
    %738 = vst [vmem:[#allocation8] sm:$0xff] %v692
    %739 = vst [vmem:[#allocation8 + $0x8] sm:$0xff] %v707
    %740 = vst [vmem:[#allocation8 + $0x10] sm:$0xff] %v722
    %741 = vst [vmem:[#allocation8 + $0x18] sm:$0xff] %v737
    // Predicated region
    $region42: #{tpu_custom_call.1} parent=1 // pred_check
      _
    $region43: #{tpu_custom_call.1} parent=1 // pred_check_branch
      %743 = sbr.rel (0) target = $region45
    $region44: #{tpu_custom_call.1} parent=1 // pred_region
      %745 = vsyncadd [#allocation4], 0
      %s746 = sshll.u32 [#allocation8], 4
      %s747 = int_to_ptr.vmem [resolvable:$true] %s746
      %s748 = sshll.u32 %s7, 4
      %s749 = int_to_ptr.hbm [resolvable:$true] %s748
      %754 = dma.vmem_to_hbm [thread:$0]  %s747, 512, %s749, [#allocation4], 256, 256, 16
    $region45: #{tpu_custom_call.1} parent=1 // pred_fallthru
      _
    // Predicated region
    $region46: #{tpu_custom_call.1} parent=1 // pred_check
      _
    $region47: #{tpu_custom_call.1} parent=1 // pred_check_branch
      %756 = sbr.rel (0) target = $region49
    $region48: #{tpu_custom_call.1} parent=1 // pred_region
      %758 = dma.done [#allocation4], 512
    $region49: #{tpu_custom_call.1} parent=1 // pred_fallthru
      _
    %759 = vsyncpa [#allocation3], 1
    %760 = vsyncpa [#allocation6], 1
    %761 = vsyncpa [#allocation4], 1

</llo_original>
